<compile_context>
chip_gen: v5e
topology: v5e:2x2
jax: 0.10.0
libtpu: 0.0.40
codegen_flags: <defaults>
</compile_context>

<pallas_src>
import jax
import jax.numpy as jnp
from jax.experimental import pallas as pl
from jax.experimental.pallas import tpu as pltpu

_COL_CANDIDATES = (8192, 4096, 2048, 1024, 512, 256, 128)


def _round_up(x, m):
    return ((x + m - 1) // m) * m


def _round_down(x, m):
    return (x // m) * m


def _vmem_capacity_bytes():
    # Trace-time hardware query; fall back to the 128 MiB (v5e/v6e) assumption
    # if the query is unavailable.
    try:
        return int(pltpu.get_tpu_info().vmem_capacity_bytes)
    except Exception:
        return 128 << 20


def _proxflayer_kernel(alpha_ref, x_ref, y_ref, o_ref):
    # alpha_ref: (1,) f32 scalar in SMEM; x/y/o: (block_rows, cols) VMEM tiles.
    a = alpha_ref[0]
    c = a / (1.0 + a)                       # scalar unit, once per grid step
    x = x_ref[...]
    y = y_ref[...]
    c = c.astype(x.dtype)
    # x + c*(y - x) == 1/(1+a)*x + a/(1+a)*y  (one fewer vector multiply).
    o_ref[...] = (x + c * (y - x)).astype(o_ref.dtype)


def proxflayer_forward(x, y, alpha, *, min_pallas_elems=1 << 20):
    """1/(1+alpha)*x + alpha/(1+alpha)*y, elementwise, via a Pallas TPU kernel.

    x, y: arrays of identical shape/dtype (e.g. NCHW activations).
    alpha: scalar learnable parameter (the nn.Parameter).
    """
    assert x.shape == y.shape and x.dtype == y.dtype
    orig_shape = x.shape
    total = int(x.size)

    alpha_f32 = jnp.asarray(alpha, dtype=jnp.float32)

    def _jax_blend(xa, ya):
        c = (alpha_f32 / (1.0 + alpha_f32)).astype(xa.dtype)
        return xa + c * (ya - xa)

    # Tiny tensors: a pallas_call is pure launch overhead; let XLA fuse instead.
    if total < min_pallas_elems:
        return _jax_blend(x, y)

    itemsize = x.dtype.itemsize

    # Pick a lane-dense column width (multiple of 128) that exactly divides the
    # element count -> no pad / no slice -> no extra HBM passes.
    cols = None
    for cand in _COL_CANDIDATES:
        if cand <= total and total % cand == 0:
            cols = cand
            break

    x_flat = x.reshape(-1)
    y_flat = y.reshape(-1)

    if cols is not None:
        bulk, tail = total, 0
        x_bulk, y_bulk = x_flat, y_flat
    else:
        # Rare fallback (total not a multiple of 128): run the kernel on the
        # 128-aligned bulk and finish the <128-element tail with plain JAX.
        tail = total % 128
        bulk = total - tail
        if bulk == 0:
            return _jax_blend(x, y)
        for cand in _COL_CANDIDATES:
            if cand <= bulk and bulk % cand == 0:
                cols = cand
                break
        x_bulk = x_flat[:bulk]
        y_bulk = y_flat[:bulk]

    rows = bulk // cols
    x2 = x_bulk.reshape(rows, cols)
    y2 = y_bulk.reshape(rows, cols)

    # Generation-aware tile budget: keep ~6x tile_bytes (3 arrays, double
    # buffered) comfortably under the per-core VMEM capacity.
    vmem_cap = _vmem_capacity_bytes()
    if vmem_cap <= (64 << 20):            # v7x: 64 MiB VMEM per TensorCore
        tile_bytes = 4 << 20              # 4 MiB/array -> ~24 MiB working set
        vmem_limit = 40 << 20
    else:                                 # v5e / v6e: 128 MiB VMEM
        tile_bytes = 8 << 20              # 8 MiB/array -> ~48 MiB working set
        vmem_limit = 64 << 20

    # Dtype-aware rows-per-tile: constant bytes per grid step, rounded to the
    # dtype's native sublane multiple (f32->8, bf16->16, int8->32).
    mult = max(8, 32 // itemsize)
    target_rows = max(mult, _round_down(tile_bytes // (cols * itemsize), mult))

    if target_rows >= rows:
        block_rows = rows                 # full extent (always a legal block)
        # Ensure >= 2 grid steps when possible so v7x megacore engages both TCs.
        if rows >= 2 * mult:
            block_rows = _round_up(pl.cdiv(rows, 2), mult)
    else:
        block_rows = target_rows

    grid = (pl.cdiv(rows, block_rows),)

    out2 = pl.pallas_call(
        _proxflayer_kernel,
        out_shape=jax.ShapeDtypeStruct((rows, cols), x.dtype),
        grid=grid,
        in_specs=[
            pl.BlockSpec(memory_space=pltpu.SMEM),               # alpha scalar
            pl.BlockSpec((block_rows, cols), lambda i: (i, 0)),  # x tile
            pl.BlockSpec((block_rows, cols), lambda i: (i, 0)),  # y tile
        ],
        out_specs=pl.BlockSpec((block_rows, cols), lambda i: (i, 0)),
        compiler_params=pltpu.CompilerParams(
            dimension_semantics=("parallel",),   # megacore-shardable on v7x
            vmem_limit_bytes=vmem_limit,
        ),
        cost_estimate=pl.CostEstimate(
            flops=3 * bulk,
            transcendentals=0,
            bytes_accessed=3 * bulk * itemsize,
        ),
    )(alpha_f32.reshape(1), x2, y2)

    out_flat = out2.reshape(-1)
    if tail:
        out_flat = jnp.concatenate(
            [out_flat, _jax_blend(x_flat[bulk:], y_flat[bulk:])]
        )
    return out_flat.reshape(orig_shape)


if __name__ == "__main__":
    key = jax.random.PRNGKey(0)
    kx, ky = jax.random.split(key)

    # Small NCHW inputs consistent with an image-denoiser module.
    x = jax.random.normal(kx, (2, 4, 16, 16), dtype=jnp.float32)
    y = jax.random.normal(ky, (2, 4, 16, 16), dtype=jnp.float32)

    # Deterministic parameter init (mirrors nn.Parameter(torch.tensor(grad_in))).
    grad_in = 0.1
    alpha = jnp.float32(grad_in)

    # min_pallas_elems=0 forces the Pallas path even at this tiny test size so
    # the kernel itself is exercised; production default skips Pallas below
    # ~1M elements where launch overhead dominates.
    out = proxflayer_forward(x, y, alpha, min_pallas_elems=0)
    out = jax.block_until_ready(out)

    # Reference check in plain JAX (exact PyTorch formula).
    ref = 1.0 / (1.0 + alpha) * x + alpha / (1.0 + alpha) * y
    assert out.shape == x.shape
    assert jnp.allclose(out, ref, atol=1e-5, rtol=1e-5), "mismatch vs reference"

    print("KERNEL_OK")
</pallas_src>

<mosaic_0001>
module attributes {stable_mosaic.version = 11 : i64} {
  func.func @_proxflayer_kernel(%arg0: i32, %arg1: memref<1xf32, #tpu.memory_space<smem>>, %arg2: memref<1x2048xf32, #tpu.memory_space<vmem>>, %arg3: memref<1x2048xf32, #tpu.memory_space<vmem>>, %arg4: memref<1x2048xf32, #tpu.memory_space<vmem>>) attributes {dimension_semantics = [#tpu.dimension_semantics<parallel>], iteration_bounds = array<i64: 1>, scalar_prefetch = 0 : i64, scratch_operands = 0 : i64, tpu.core_type = #tpu.core_type<tc>, window_params = [{transform_indices = @transform_0, window_bounds = array<i64: 1>}, {transform_indices = @transform_1, window_bounds = array<i64: 1, 2048>}, {transform_indices = @transform_2, window_bounds = array<i64: 1, 2048>}, {transform_indices = @transform_3, window_bounds = array<i64: 1, 2048>}]} {
    %c0 = arith.constant 0 : index
    %0 = memref.load %arg1[%c0] : memref<1xf32, #tpu.memory_space<smem>>
    %cst = arith.constant 1.000000e+00 : f32
    %1 = arith.addf %cst, %0 : f32
    %2 = arith.divf %0, %1 : f32
    %c0_0 = arith.constant 0 : index
    %c0_1 = arith.constant 0 : index
    %3 = vector.load %arg2[%c0_0, %c0_1] : memref<1x2048xf32, #tpu.memory_space<vmem>>, vector<1x2048xf32>
    %c0_2 = arith.constant 0 : index
    %c0_3 = arith.constant 0 : index
    %4 = vector.load %arg3[%c0_2, %c0_3] : memref<1x2048xf32, #tpu.memory_space<vmem>>, vector<1x2048xf32>
    %5 = arith.subf %4, %3 : vector<1x2048xf32>
    %6 = vector.broadcast %2 : f32 to vector<1x2048xf32>
    %7 = arith.mulf %6, %5 : vector<1x2048xf32>
    %8 = arith.addf %3, %7 : vector<1x2048xf32>
    %c0_4 = arith.constant 0 : index
    %c0_5 = arith.constant 0 : index
    %9 = vector.load %arg4[%c0_4, %c0_5] : memref<1x2048xf32, #tpu.memory_space<vmem>>, vector<1x2048xf32>
    tpu.vector_store %arg4[%c0_4, %c0_5], %8 {strides = array<i32>} : memref<1x2048xf32, #tpu.memory_space<vmem>>, vector<1x2048xf32>,
    return
  }
  func.func @transform_0(%arg0: i32) -> i32 {
    %c0_i32 = arith.constant 0 : i32
    %c0_i32_0 = arith.constant 0 : i32
    return %c0_i32 : i32
  }
  func.func @transform_1(%arg0: i32) -> (i32, i32) {
    %c0_i32 = arith.constant 0 : i32
    %c0_i32_0 = arith.constant 0 : i32
    return %arg0, %c0_i32 : i32, i32
  }
  func.func @transform_2(%arg0: i32) -> (i32, i32) {
    %c0_i32 = arith.constant 0 : i32
    %c0_i32_0 = arith.constant 0 : i32
    return %arg0, %c0_i32 : i32, i32
  }
  func.func @transform_3(%arg0: i32) -> (i32, i32) {
    %c0_i32 = arith.constant 0 : i32
    %c0_i32_0 = arith.constant 0 : i32
    return %arg0, %c0_i32 : i32, i32
  }
}

</mosaic_0001>

<llo_original>
// kernel: tpu_custom_call.1
$region0: #{tpu_custom_call.1}
  #allocation0 [shape = 'u32[]', space=smem, size = 0x4, offset = 0x4, fixed_abs, tag = 'smem constant byte address 0x4 - core index']
  #allocation1 [shape = 'u32[72,128]{1,0:T(1,128)}', space=vmem, size = 0x9000, scoped, tag = 'internal scratch']
  #allocation2 [shape = 'f32[1]{0:T(128)S(6)}', space=smem, size = 0x200, scoped, tag = 'scoped memory for tpu_custom_call.1']
  %s0 = inlined_call_operand.<no memory space> [shape: f32[1], index: 0, kind: input, shape index: {}]
  %s1 = inlined_call_operand.hbm [shape: f32[1,2048], index: 1, kind: input, shape index: {}]
  %s2 = inlined_call_operand.hbm [shape: f32[1,2048], index: 2, kind: input, shape index: {}]
  %s3 = inlined_call_operand.hbm [shape: f32[1,2048], index: 3, kind: output, shape index: {}]
  %s4 = sld [smem:[#allocation0]]
  $region30: #{tpu_custom_call.1} parent=0
    _
  %s6 = ssub.s32 1, %s4
  %s7 = scalar_select 0, %s6, %s4
  %8 = sst [smem:[#allocation2]] %s0
  $region1: #{tpu_custom_call.1} parent=0
    #allocation3 [shape = 'u8[8192]{0}', space=vmem, size = 0x2000, scoped, tag = 'input window, operand 1, single buffered']
    #allocation4 [shape = 's32[1]{0}', space=sflag, size = 0x4, scoped, tag = 'scoped memory for tpu_custom_call.1']
    #allocation5 [shape = 's32[1]{0}', space=sflag, size = 0x4, scoped, tag = 'scoped memory for tpu_custom_call.1']
    #allocation6 [shape = 'u8[8192]{0}', space=vmem, size = 0x2000, scoped, tag = 'input window, operand 2, single buffered']
    #allocation7 [shape = 's32[1]{0}', space=sflag, size = 0x4, scoped, tag = 'scoped memory for tpu_custom_call.1']
    #allocation8 [shape = 'u8[8192]{0}', space=vmem, size = 0x2000, scoped, tag = 'output window, operand 0, single buffered']
    %9 = vsyncpa [#allocation4], 0
    %10 = vsyncpa [#allocation7], 0
    %11 = vsyncpa [#allocation5], 0
    // Predicated region
    $region2: #{tpu_custom_call.1} parent=1 // pred_check
      _
    $region3: #{tpu_custom_call.1} parent=1 // pred_check_branch
      %13 = sbr.rel (0) target = $region5
    $region4: #{tpu_custom_call.1} parent=1 // pred_region
      _
    $region5: #{tpu_custom_call.1} parent=1 // pred_fallthru
      _
    // Predicated region
    $region6: #{tpu_custom_call.1} parent=1 // pred_check
      _
    $region7: #{tpu_custom_call.1} parent=1 // pred_check_branch
      %15 = sbr.rel (0) target = $region9
    $region8: #{tpu_custom_call.1} parent=1 // pred_region
      %17 = vsyncadd [#allocation4], 0
      %s19 = sshll.u32 %s1, 4
      %s20 = int_to_ptr.hbm [resolvable:$true] %s19
      %s21 = sshll.u32 [#allocation3], 4
      %s22 = int_to_ptr.vmem [resolvable:$true] %s21
      %24 = dma.hbm_to_vmem [thread:$0]  %s20, 256, %s22, [#allocation4]
    $region9: #{tpu_custom_call.1} parent=1 // pred_fallthru
      _
    // Predicated region
    $region10: #{tpu_custom_call.1} parent=1 // pred_check
      _
    $region11: #{tpu_custom_call.1} parent=1 // pred_check_branch
      %26 = sbr.rel (0) target = $region13
    $region12: #{tpu_custom_call.1} parent=1 // pred_region
      %28 = vsyncadd [#allocation7], 0
      %s30 = sshll.u32 %s2, 4
      %s31 = int_to_ptr.hbm [resolvable:$true] %s30
      %s32 = sshll.u32 [#allocation6], 4
      %s33 = int_to_ptr.vmem [resolvable:$true] %s32
      %35 = dma.hbm_to_vmem [thread:$0]  %s31, 256, %s33, [#allocation7]
    $region13: #{tpu_custom_call.1} parent=1 // pred_fallthru
      _
    // Predicated region
    $region14: #{tpu_custom_call.1} parent=1 // pred_check
      _
    $region15: #{tpu_custom_call.1} parent=1 // pred_check_branch
      %37 = sbr.rel (0) target = $region17
    $region16: #{tpu_custom_call.1} parent=1 // pred_region
      %39 = dma.done [#allocation4], 256
    $region17: #{tpu_custom_call.1} parent=1 // pred_fallthru
      _
    // Predicated region
    $region18: #{tpu_custom_call.1} parent=1 // pred_check
      _
    $region19: #{tpu_custom_call.1} parent=1 // pred_check_branch
      %41 = sbr.rel (0) target = $region21
    $region20: #{tpu_custom_call.1} parent=1 // pred_region
      %43 = dma.done [#allocation7], 256
    $region21: #{tpu_custom_call.1} parent=1 // pred_fallthru
      _
    %s44 = sld [smem:[#allocation2]]
    %s45 = sadd.f32 %s44, 1.0
    %v46 = vstv %s45
    %v47 = vrcp.pop %v46
    %v48 = vmul.f32 %v46, %v47
    %v49 = vsub.f32 1.0, %v48
    %v50 = vmul.f32 %v47, %v49
    %v51 = vadd.f32 %v47, %v50
    %vm52 = vweird.f32 %v46
    %vm53 = vweird.f32 %v47
    %vm54 = vmor %vm52, %vm53
    %v55 = vsel %vm54, %v47, %v51
    %v56 = vand.u32 2147483647, %v46
    %vm57 = vcmp.eq.f32.partialorder %v56, 8.507059e+37
    %v58 = vand.u32 %v46, 2147483648
    %v59 = vor.u32 1.1754944e-38, %v58
    %v60 = vsel %vm57, %v59, %v55
    %s61 = vtos %v60
    %s62 = smul.f32 %s44, %s61
    %v63 = vld [vmem:[#allocation3] sm:$0xff]
    %v64 = vld [vmem:[#allocation3 + $0x8] sm:$0xff]
    %v65 = vld [vmem:[#allocation6] sm:$0xff]
    %v66 = vld [vmem:[#allocation6 + $0x8] sm:$0xff]
    %v67 = vsub.f32 %v65, %v63
    %v68 = vsub.f32 %v66, %v64
    %v69 = vstv %s62
    %v70 = vmul.f32 %v69, %v67
    %v71 = vmul.f32 %v69, %v68
    %v72 = vadd.f32 %v63, %v70
    %v73 = vadd.f32 %v64, %v71
    %74 = vst [vmem:[#allocation8] sm:$0xff] %v72
    %75 = vst [vmem:[#allocation8 + $0x8] sm:$0xff] %v73
    // Predicated region
    $region22: #{tpu_custom_call.1} parent=1 // pred_check
      _
    $region23: #{tpu_custom_call.1} parent=1 // pred_check_branch
      %77 = sbr.rel (0) target = $region25
    $region24: #{tpu_custom_call.1} parent=1 // pred_region
      %79 = vsyncadd [#allocation5], 0
      %s81 = sshll.u32 [#allocation8], 4
      %s82 = int_to_ptr.vmem [resolvable:$true] %s81
      %s83 = sshll.u32 %s3, 4
      %s84 = int_to_ptr.hbm [resolvable:$true] %s83
      %86 = dma.vmem_to_hbm [thread:$0]  %s82, 256, %s84, [#allocation5]
    $region25: #{tpu_custom_call.1} parent=1 // pred_fallthru
      _
    // Predicated region
    $region26: #{tpu_custom_call.1} parent=1 // pred_check
      _
    $region27: #{tpu_custom_call.1} parent=1 // pred_check_branch
      %88 = sbr.rel (0) target = $region29
    $region28: #{tpu_custom_call.1} parent=1 // pred_region
      %90 = dma.done [#allocation5], 256
    $region29: #{tpu_custom_call.1} parent=1 // pred_fallthru
      _
    %91 = vsyncpa [#allocation4], 1
    %92 = vsyncpa [#allocation7], 1
    %93 = vsyncpa [#allocation5], 1

</llo_original>
